<compile_context>
chip_gen: v6e
topology: v6e:2x2x1
jax: 0.10.0
libtpu: 0.0.40
codegen_flags: <defaults>
</compile_context>

<pallas_src>
import jax
import jax.numpy as jnp
from jax.experimental import pallas as pl
from jax.experimental.pallas import tpu as pltpu


def _gabor_kernel(x_ref, omega_ref, sigma_ref, o_ref):
    # x_ref / o_ref: (T, THW) block;  omega_ref / sigma_ref: (T, 1) f32.
    x = x_ref[...].astype(jnp.float32)
    omega = omega_ref[...]          # (T, 1) — broadcast by the multiply
    neg_sigma = -sigma_ref[...]     # (T, 1)
    gabor = jnp.exp(neg_sigma * (x * x)) * jnp.cos(omega * x)
    o_ref[...] = (x * gabor).astype(o_ref.dtype)


def _round_up(n, m):
    return ((n + m - 1) // m) * m


def _tile_config(target_tile_bytes):
    """Pick (tile_bytes, vmem_limit_bytes), generation-aware when possible."""
    vmem_cap = None
    kind = ""
    try:
        vmem_cap = pltpu.get_tpu_info().vmem_capacity_bytes
    except Exception:
        pass
    try:
        kind = jax.devices()[0].device_kind.lower()
    except Exception:
        pass

    if target_tile_bytes is None:
        if vmem_cap is not None and vmem_cap <= (80 << 20):
            # v7x-class: 64 MiB physical VMEM, 3.2 TB/s HBM -> bigger tiles.
            target_tile_bytes = 6 << 20
        elif ("v5e" in kind) or ("v5 lite" in kind) or ("v5lite" in kind):
            # v5e: ~0.82 TB/s HBM, 16 MiB scoped default -> small tiles suffice.
            target_tile_bytes = 2 << 20
        else:
            # v6e / other (128 MiB physical VMEM).
            target_tile_bytes = 4 << 20

    # Double-buffered in + out (~4x tile) plus headroom for f32 temporaries.
    vmem_limit = int(min(6 * target_tile_bytes + (8 << 20), 48 << 20))
    return int(target_tile_bytes), vmem_limit


def sfif_forward(x, omega0, sigma, *,
                 target_tile_bytes=None,
                 max_lane_tile=8192):
    """x: (B, C, H, W); omega0, sigma: (C, 1, 1). Returns (B, C, H, W)."""
    B, C, H, W = x.shape
    HW = H * W
    itemsize = jnp.dtype(x.dtype).itemsize
    # Minimum sublane tile by element width: f32 -> 8, bf16 -> 16, int8 -> 32.
    min_sub = {4: 8, 2: 16, 1: 32}.get(itemsize, 8)

    tile_bytes, vmem_limit = _tile_config(target_tile_bytes)

    # Lane (last-dim) tiling.  thw is either the full HW (always a legal
    # block shape) or a multiple of 128; ragged final blocks are masked by
    # Pallas — no HBM-side padding.
    max_lane_tile = max(128, (max_lane_tile // 128) * 128)
    thw = HW if HW <= max_lane_tile else max_lane_tile

    omega_c = omega0.reshape(C, 1).astype(jnp.float32)
    sigma_c = sigma.reshape(C, 1).astype(jnp.float32)

    def sub_tile(rows):
        t = (tile_bytes // (thw * itemsize)) // min_sub * min_sub
        t = max(min_sub, t)
        return min(t, rows)

    compiler_params = lambda ndims: pltpu.CompilerParams(
        dimension_semantics=("parallel",) * ndims,
        vmem_limit_bytes=vmem_limit,
    )

    if C >= min_sub:
        # ---- 3-D path: (B, C, HW), params (C, 1) picked by index_map. ----
        tc = sub_tile(C)
        # >= 2 grid points (v7x megacore): split the lane axis, keep sublanes full.
        if B * pl.cdiv(C, tc) * pl.cdiv(HW, thw) < 2 and thw >= 256:
            thw = _round_up(thw // 2, 128)
        grid = (B, pl.cdiv(C, tc), pl.cdiv(HW, thw))

        x3 = x.reshape(B, C, HW)
        out3 = pl.pallas_call(
            _gabor_kernel,
            out_shape=jax.ShapeDtypeStruct((B, C, HW), x.dtype),
            grid_spec=pltpu.PrefetchScalarGridSpec(
                num_scalar_prefetch=0,
                grid=grid,
                in_specs=[
                    pl.BlockSpec((pl.Squeezed(), tc, thw),
                                 lambda b, c, h: (b, c, h)),
                    pl.BlockSpec((tc, 1), lambda b, c, h: (c, 0)),
                    pl.BlockSpec((tc, 1), lambda b, c, h: (c, 0)),
                ],
                out_specs=pl.BlockSpec((pl.Squeezed(), tc, thw),
                                       lambda b, c, h: (b, c, h)),
            ),
            compiler_params=compiler_params(3),
        )(x3, omega_c, sigma_c)
        return out3.reshape(B, C, H, W)

    # ---- 2-D path (C < min_sub): flatten (B, C) -> B*C rows so every vreg
    # keeps full sublane occupancy; params tiled to (B*C, 1) (negligible). ----
    R = B * C
    tr = sub_tile(R)
    if pl.cdiv(R, tr) * pl.cdiv(HW, thw) < 2 and thw >= 256:
        thw = _round_up(thw // 2, 128)
    grid = (pl.cdiv(R, tr), pl.cdiv(HW, thw))

    x2 = x.reshape(R, HW)
    omega_r = jnp.tile(omega_c, (B, 1))   # (B*C, 1)
    sigma_r = jnp.tile(sigma_c, (B, 1))

    out2 = pl.pallas_call(
        _gabor_kernel,
        out_shape=jax.ShapeDtypeStruct((R, HW), x.dtype),
        grid_spec=pltpu.PrefetchScalarGridSpec(
            num_scalar_prefetch=0,
            grid=grid,
            in_specs=[
                pl.BlockSpec((tr, thw), lambda r, h: (r, h)),
                pl.BlockSpec((tr, 1), lambda r, h: (r, 0)),
                pl.BlockSpec((tr, 1), lambda r, h: (r, 0)),
            ],
            out_specs=pl.BlockSpec((tr, thw), lambda r, h: (r, h)),
        ),
        compiler_params=compiler_params(2),
    )(x2, omega_r, sigma_r)
    return out2.reshape(B, C, H, W)


def _reference(x, omega0, sigma):
    xf = x.astype(jnp.float32)
    om = omega0.reshape(1, -1, 1, 1).astype(jnp.float32)
    sg = sigma.reshape(1, -1, 1, 1).astype(jnp.float32)
    gabor = jnp.exp(-sg * xf ** 2) * jnp.cos(om * xf)
    return xf * gabor


if __name__ == "__main__":
    key = jax.random.PRNGKey(0)
    k_x, k_omega, k_sigma, k_x2, k_x3 = jax.random.split(key, 5)

    # Case 1: module-sized small example (C < sublane min -> flattened path).
    B, C, H, W = 2, 4, 16, 16
    x = jax.random.normal(k_x, (B, C, H, W), dtype=jnp.float32)
    omega0 = jax.random.normal(k_omega, (C, 1, 1), dtype=jnp.float32)
    sigma = jax.random.normal(k_sigma, (C, 1, 1), dtype=jnp.float32)

    out = jax.block_until_ready(sfif_forward(x, omega0, sigma))
    ref = _reference(x, omega0, sigma)
    assert out.shape == (B, C, H, W)
    assert jnp.allclose(out, ref, atol=1e-5, rtol=1e-5)

    # Case 2: 3-D path, HW not a multiple of the lane tile (ragged final block).
    B2, C2, H2, W2 = 2, 16, 12, 12
    x2 = jax.random.normal(k_x2, (B2, C2, H2, W2), dtype=jnp.float32)
    om2 = jax.random.normal(k_omega, (C2, 1, 1), dtype=jnp.float32)
    sg2 = jax.random.normal(k_sigma, (C2, 1, 1), dtype=jnp.float32)
    out2 = jax.block_until_ready(
        sfif_forward(x2, om2, sg2, max_lane_tile=128))  # forces a partial h-block
    assert jnp.allclose(out2, _reference(x2, om2, sg2), atol=1e-5, rtol=1e-5)

    # Case 3: bf16 I/O (f32 internal math), non-128-multiple HW.
    B3, C3, H3, W3 = 1, 8, 12, 12
    x3 = jax.random.normal(k_x3, (B3, C3, H3, W3), dtype=jnp.float32).astype(jnp.bfloat16)
    om3 = jax.random.normal(k_omega, (C3, 1, 1), dtype=jnp.float32)
    sg3 = jax.random.normal(k_sigma, (C3, 1, 1), dtype=jnp.float32)
    out3 = jax.block_until_ready(sfif_forward(x3, om3, sg3))
    assert out3.dtype == jnp.bfloat16
    assert jnp.allclose(out3.astype(jnp.float32), _reference(x3, om3, sg3),
                        atol=2e-2, rtol=2e-2)

    print("KERNEL_OK")
</pallas_src>

<mosaic_0001>
module attributes {stable_mosaic.version = 11 : i64} {
  func.func @_gabor_kernel(%arg0: i32, %arg1: i32, %arg2: memref<8x128xf32, #tpu.memory_space<vmem>>, %arg3: memref<8x1xf32, #tpu.memory_space<vmem>>, %arg4: memref<8x1xf32, #tpu.memory_space<vmem>>, %arg5: memref<8x128xf32, #tpu.memory_space<vmem>>) attributes {dimension_semantics = [#tpu.dimension_semantics<parallel>, #tpu.dimension_semantics<parallel>], iteration_bounds = array<i64: 1, 2>, scalar_prefetch = 0 : i64, scratch_operands = 0 : i64, tpu.core_type = #tpu.core_type<tc>, window_params = [{transform_indices = @transform_0, window_bounds = array<i64: 8, 128>}, {transform_indices = @transform_1, window_bounds = array<i64: 8, 1>}, {transform_indices = @transform_2, window_bounds = array<i64: 8, 1>}, {transform_indices = @transform_3, window_bounds = array<i64: 8, 128>}]} {
    %c0 = arith.constant 0 : index
    %c0_0 = arith.constant 0 : index
    %0 = vector.load %arg2[%c0, %c0_0] : memref<8x128xf32, #tpu.memory_space<vmem>>, vector<8x128xf32>
    %c0_1 = arith.constant 0 : index
    %c0_2 = arith.constant 0 : index
    %1 = vector.load %arg3[%c0_1, %c0_2] : memref<8x1xf32, #tpu.memory_space<vmem>>, vector<8x1xf32>
    %c0_3 = arith.constant 0 : index
    %c0_4 = arith.constant 0 : index
    %2 = vector.load %arg4[%c0_3, %c0_4] : memref<8x1xf32, #tpu.memory_space<vmem>>, vector<8x1xf32>
    %cst = arith.constant 0.000000e+00 : f32
    %3 = vector.broadcast %cst : f32 to vector<8x1xf32>
    %4 = arith.subf %3, %2 : vector<8x1xf32>
    %5 = arith.mulf %0, %0 : vector<8x128xf32>
    %6 = vector.broadcast %4 : vector<8x1xf32> to vector<8x128xf32>
    %7 = arith.mulf %6, %5 : vector<8x128xf32>
    %8 = math.exp %7 : vector<8x128xf32>
    %9 = vector.broadcast %1 : vector<8x1xf32> to vector<8x128xf32>
    %10 = arith.mulf %9, %0 : vector<8x128xf32>
    %11 = math.cos %10 : vector<8x128xf32>
    %12 = arith.mulf %8, %11 : vector<8x128xf32>
    %13 = arith.mulf %0, %12 : vector<8x128xf32>
    %c0_5 = arith.constant 0 : index
    %c0_6 = arith.constant 0 : index
    %14 = vector.load %arg5[%c0_5, %c0_6] : memref<8x128xf32, #tpu.memory_space<vmem>>, vector<8x128xf32>
    tpu.vector_store %arg5[%c0_5, %c0_6], %13 {strides = array<i32>} : memref<8x128xf32, #tpu.memory_space<vmem>>, vector<8x128xf32>,
    return
  }
  func.func @transform_0(%arg0: i32, %arg1: i32) -> (i32, i32) {
    %c0_i32 = arith.constant 0 : i32
    return %arg0, %arg1 : i32, i32
  }
  func.func @transform_1(%arg0: i32, %arg1: i32) -> (i32, i32) {
    %c0_i32 = arith.constant 0 : i32
    %c0_i32_0 = arith.constant 0 : i32
    return %arg0, %c0_i32 : i32, i32
  }
  func.func @transform_2(%arg0: i32, %arg1: i32) -> (i32, i32) {
    %c0_i32 = arith.constant 0 : i32
    %c0_i32_0 = arith.constant 0 : i32
    return %arg0, %c0_i32 : i32, i32
  }
  func.func @transform_3(%arg0: i32, %arg1: i32) -> (i32, i32) {
    %c0_i32 = arith.constant 0 : i32
    return %arg0, %arg1 : i32, i32
  }
}

</mosaic_0001>

<llo_original>
// kernel: tpu_custom_call.1
$region0: #{tpu_custom_call.1}
  #allocation0 [shape = 'u32[]', space=smem, size = 0x4, offset = 0x4, fixed_abs, tag = 'smem constant byte address 0x4 - core index']
  #allocation1 [shape = 'u32[144,128]{1,0:T(1,128)}', space=vmem, size = 0x12000, scoped, tag = 'internal scratch']
  %s0 = inlined_call_operand.vmem [shape: f32[8,256], index: 0, kind: input, shape index: {}]
  %s1 = inlined_call_operand.vmem [shape: f32[8,1], index: 1, kind: input, shape index: {}]
  %s2 = inlined_call_operand.vmem [shape: f32[8,1], index: 2, kind: input, shape index: {}]
  %s3 = inlined_call_operand.hbm [shape: f32[8,256], index: 3, kind: output, shape index: {}]
  %s4 = sld [smem:[#allocation0]]
  $region45: #{tpu_custom_call.1} parent=0
    _
  %s6 = ssub.s32 1, %s4
  %s7 = scalar_select 0, %s6, %s4
  $region1: #{tpu_custom_call.1} parent=0
    #allocation2 [shape = 'u8[8192]{0}', space=vmem, size = 0x2000, scoped, tag = 'output window, operand 0']
    #allocation3 [shape = 's32[2]{0}', space=sflag, size = 0x8, scoped, tag = 'scoped memory for tpu_custom_call.1']
    %8 = vsyncpa [#allocation3], 0
    %s9 = scalar_lea.sflag [#allocation3], 1
    %10 = vsyncpa %s9, 0
    loop: start=0, step=1, limit=4
    $region2: #{tpu_custom_call.1} parent=1 // loop_pre_header
      _
    $region3: #{tpu_custom_call.1} parent=1 // loop_header
      %s12 = sphi 0, %s16
      %p13 = scmp.ge.s32.totalorder %s12, 4
      %s19 = sphi 0, %s31
      %s20 = sphi 0, %s27
      %s21 = sphi 0, %s19
      %s22 = sphi 0, %s20
      %s23 = sphi 0, %s21
      %s24 = sphi 0, %s22
      %s36 = sphi 0, %s38
      %s39 = sphi 0, %s36
      %s40 = sphi 0, %s39
      %s56 = sphi 0, %s40
      %s62 = sphi 0, %s64
      %s65 = sphi 0, %s62
      %s66 = sphi 0, %s65
      %s82 = sphi 0, %s66
      %s88 = sphi 0, %s90
      %s91 = sphi 0, %s88
      %s92 = sphi 0, %s91
      %s108 = sphi 0, %s92
      %s116 = sphi 0, %s118
      %s119 = sphi 0, %s116
      %s120 = sphi 0, %s119
      %s136 = sphi 0, %s120
    $region4: #{tpu_custom_call.1} parent=1 // loop_header_branch
      %15 = sbr.rel (%p13) target = $region8
    $region5: #{tpu_custom_call.1} parent=1 // loop_body
      %s17 = ssub.s32 %s12, 1
      %s18 = ssub.s32 %s12, 2
      %s25 = sadd.s32 1, %s20
      %p26 = scmp.ge.s32.totalorder %s25, 2
      %s27 = scalar_select %p26, 0, %s25
      %s28 = sadd.s32 1, %s19
      %s29 = scalar_select %p26, %s28, %s19
      %p30 = scmp.ge.s32.totalorder %s29, 1
      %s31 = scalar_select %p30, 0, %s29
      %s32 = ssub.s32 %s19, %s31
      %s33 = ssub.s32 %s20, %s27
      %s34 = sor.u32 %s32, %s33
      %p35 = scmp.eq.s32.totalorder %s34, 0
      %s37 = sadd.s32 %s36, 1
      %s38 = scalar_select %p35, %s36, %s37
      %p41 = pneg %p35
      %p42 = scmp.eq.s32.totalorder %s12, 1
      %p43 = por %p41, %p42
      %p44 = scmp.ne.s32.totalorder %s36, %s39
      %p45 = scmp.eq.s32.totalorder %s12, 0
      %p46 = por %p44, %p45
      %p47 = scmp.ne.s32.totalorder %s36, %s39
      %p48 = scmp.eq.s32.totalorder %s17, 1
      %p49 = por %p47, %p48
      %p50 = scmp.ne.s32.totalorder %s39, %s40
      %p51 = scmp.eq.s32.totalorder %s17, 0
      %p52 = por %p50, %p51
      %p53 = scmp.ne.s32.totalorder %s39, %s40
      %p54 = scmp.eq.s32.totalorder %s18, 1
      %p55 = por %p53, %p54
      %p57 = scmp.ne.s32.totalorder %s40, %s56
      %p58 = scmp.eq.s32.totalorder %s18, 0
      %p59 = por %p57, %p58
      %s60 = ssub.s32 %s19, %s31
      %p61 = scmp.eq.s32.totalorder %s60, 0
      %s63 = sadd.s32 %s62, 1
      %s64 = scalar_select %p61, %s62, %s63
      %p67 = pneg %p61
      %p68 = scmp.eq.s32.totalorder %s12, 1
      %p69 = por %p67, %p68
      %p70 = scmp.ne.s32.totalorder %s62, %s65
      %p71 = scmp.eq.s32.totalorder %s12, 0
      %p72 = por %p70, %p71
      %p73 = scmp.ne.s32.totalorder %s62, %s65
      %p74 = scmp.eq.s32.totalorder %s17, 1
      %p75 = por %p73, %p74
      %p76 = scmp.ne.s32.totalorder %s65, %s66
      %p77 = scmp.eq.s32.totalorder %s17, 0
      %p78 = por %p76, %p77
      %p79 = scmp.ne.s32.totalorder %s65, %s66
      %p80 = scmp.eq.s32.totalorder %s18, 1
      %p81 = por %p79, %p80
      %p83 = scmp.ne.s32.totalorder %s66, %s82
      %p84 = scmp.eq.s32.totalorder %s18, 0
      %p85 = por %p83, %p84
      %s86 = ssub.s32 %s19, %s31
      %p87 = scmp.eq.s32.totalorder %s86, 0
      %s89 = sadd.s32 %s88, 1
      %s90 = scalar_select %p87, %s88, %s89
      %p93 = pneg %p87
      %p94 = scmp.eq.s32.totalorder %s12, 1
      %p95 = por %p93, %p94
      %p96 = scmp.ne.s32.totalorder %s88, %s91
      %p97 = scmp.eq.s32.totalorder %s12, 0
      %p98 = por %p96, %p97
      %p99 = scmp.ne.s32.totalorder %s88, %s91
      %p100 = scmp.eq.s32.totalorder %s17, 1
      %p101 = por %p99, %p100
      %p102 = scmp.ne.s32.totalorder %s91, %s92
      %p103 = scmp.eq.s32.totalorder %s17, 0
      %p104 = por %p102, %p103
      %p105 = scmp.ne.s32.totalorder %s91, %s92
      %p106 = scmp.eq.s32.totalorder %s18, 1
      %p107 = por %p105, %p106
      %p109 = scmp.ne.s32.totalorder %s92, %s108
      %p110 = scmp.eq.s32.totalorder %s18, 0
      %p111 = por %p109, %p110
      %s112 = ssub.s32 %s19, %s31
      %s113 = ssub.s32 %s20, %s27
      %s114 = sor.u32 %s112, %s113
      %p115 = scmp.eq.s32.totalorder %s114, 0
      %s117 = sadd.s32 %s116, 1
      %s118 = scalar_select %p115, %s116, %s117
      %p121 = pneg %p115
      %p122 = scmp.eq.s32.totalorder %s12, 1
      %p123 = por %p121, %p122
      %p124 = scmp.ne.s32.totalorder %s116, %s119
      %p125 = scmp.eq.s32.totalorder %s12, 0
      %p126 = por %p124, %p125
      %p127 = scmp.ne.s32.totalorder %s116, %s119
      %p128 = scmp.eq.s32.totalorder %s17, 1
      %p129 = por %p127, %p128
      %p130 = scmp.ne.s32.totalorder %s119, %s120
      %p131 = scmp.eq.s32.totalorder %s17, 0
      %p132 = por %p130, %p131
      %p133 = scmp.ne.s32.totalorder %s119, %s120
      %p134 = scmp.eq.s32.totalorder %s18, 1
      %p135 = por %p133, %p134
      %p137 = scmp.ne.s32.totalorder %s120, %s136
      %p138 = scmp.eq.s32.totalorder %s18, 0
      %p139 = por %p137, %p138
      %p140 = scmp.le.s32.totalorder 1, %s12
      %p141 = scmp.lt.s32.totalorder %s12, 3
      %p142 = pnand %p140, %p141
      %p143 = pneg %p142
      // Predicated region
      $region9: #{tpu_custom_call.1} parent=5 // pred_check
        _
      $region10: #{tpu_custom_call.1} parent=5 // pred_check_branch
        %145 = sbr.rel (%p142) target = $region12
      $region11: #{tpu_custom_call.1} parent=5 // pred_region
        %s146 = ssub.s32 %s12, 1
        // Predicated region
        $region13: #{tpu_custom_call.1} parent=11 // pred_check
          %p147 = pneg %p78
        $region14: #{tpu_custom_call.1} parent=11 // pred_check_branch
          %149 = sbr.rel (%p147) target = $region16
        $region15: #{tpu_custom_call.1} parent=11 // pred_region
          %p150 = scmp.lt.s32.totalorder %s21, 0
          %s151 = scalar_select %p150, %s21, 0
          %s152 = smul.addr %s151, 8
          %s153 = scalar_lea.vmem %s1, %s152
        $region16: #{tpu_custom_call.1} parent=11 // pred_fallthru
          _
        // Predicated region
        $region17: #{tpu_custom_call.1} parent=11 // pred_check
          %p154 = pneg %p104
        $region18: #{tpu_custom_call.1} parent=11 // pred_check_branch
          %156 = sbr.rel (%p154) target = $region20
        $region19: #{tpu_custom_call.1} parent=11 // pred_region
          %p157 = scmp.lt.s32.totalorder %s21, 0
          %s158 = scalar_select %p157, %s21, 0
          %s159 = smul.addr %s158, 8
          %s160 = scalar_lea.vmem %s2, %s159
        $region20: #{tpu_custom_call.1} parent=11 // pred_fallthru
          _
      $region12: #{tpu_custom_call.1} parent=5 // pred_fallthru
        _
      %p161 = scmp.lt.s32.totalorder %s12, 2
      // Predicated region
      $region21: #{tpu_custom_call.1} parent=5 // pred_check
        %p162 = pneg %p161
      $region22: #{tpu_custom_call.1} parent=5 // pred_check_branch
        %164 = sbr.rel (%p162) target = $region24
      $region23: #{tpu_custom_call.1} parent=5 // pred_region
        // Predicated region
        $region25: #{tpu_custom_call.1} parent=23 // pred_check
          %p165 = pneg %p46
        $region26: #{tpu_custom_call.1} parent=23 // pred_check_branch
          %167 = sbr.rel (%p165) target = $region28
        $region27: #{tpu_custom_call.1} parent=23 // pred_region
          %p168 = scmp.lt.s32.totalorder %s19, 0
          %s169 = scalar_select %p168, %s19, 0
          %p170 = scmp.lt.s32.totalorder %s20, 1
          %s171 = scalar_select %p170, %s20, 1
          %s172 = smul.addr %s169, 2
          %s173 = sadd.s32 %s171, %s172
          %s174 = smul.addr %s173, 8
          %s175 = scalar_lea.vmem %s0, %s174
        $region28: #{tpu_custom_call.1} parent=23 // pred_fallthru
          _
      $region24: #{tpu_custom_call.1} parent=5 // pred_fallthru
        _
      %p176 = scmp.le.s32.totalorder 1, %s12
      %p177 = scmp.lt.s32.totalorder %s12, 3
      %p178 = pnand %p176, %p177
      %p179 = pneg %p178
      // Predicated region
      $region29: #{tpu_custom_call.1} parent=5 // pred_check
        _
      $region30: #{tpu_custom_call.1} parent=5 // pred_check_branch
        %181 = sbr.rel (%p178) target = $region32
      $region31: #{tpu_custom_call.1} parent=5 // pred_region
        %s182 = ssub.s32 %s12, 1
        %p183 = scmp.lt.s32.totalorder %s21, 0
        %s184 = scalar_select %p183, %s21, 0
        %p185 = scmp.lt.s32.totalorder %s22, 1
        %s186 = scalar_select %p185, %s22, 1
        %s187 = smul.addr %s184, 2
        %s188 = sadd.s32 %s186, %s187
        %s189 = smul.addr %s188, 8
        %s190 = scalar_lea.vmem %s0, %s189
        %p191 = pneg %p52
        %p192 = pneg %p49
        %p193 = scmp.lt.s32.totalorder %s21, 0
        %s194 = scalar_select %p193, %s21, 0
        %s195 = smul.addr %s194, 8
        %s196 = scalar_lea.vmem %s1, %s195
        %p197 = pneg %p78
        %p198 = pneg %p75
        %p199 = scmp.lt.s32.totalorder %s21, 0
        %s200 = scalar_select %p199, %s21, 0
        %s201 = smul.addr %s200, 8
        %s202 = scalar_lea.vmem %s2, %s201
        %p203 = pneg %p104
        %p204 = pneg %p101
        %p205 = pneg %p132
        %p206 = pneg %p129
        %s207 = sand.u32 %s119, 1
        %s208 = scalar_lea.sflag [#allocation3], %s207
        %s209 = sand.u32 %s119, 1
        %s210 = smul.addr %s209, 8
        %s211 = scalar_lea.vmem [#allocation2], %s210
        %p212 = scmp.lt.s32.totalorder %s21, 0
        %s213 = scalar_select %p212, %s21, 0
        %p214 = scmp.lt.s32.totalorder %s22, 1
        %s215 = scalar_select %p214, %s22, 1
        %s216 = smul.addr %s213, 2
        %s217 = sadd.s32 %s215, %s216
        %s218 = smul.addr %s217, 8
        %s219 = scalar_lea.vmem %s0, %s218
        %p220 = scmp.lt.s32.totalorder %s21, 0
        %s221 = scalar_select %p220, %s21, 0
        %s222 = smul.addr %s221, 8
        %s223 = scalar_lea.vmem %s1, %s222
        %p224 = scmp.lt.s32.totalorder %s21, 0
        %s225 = scalar_select %p224, %s21, 0
        %s226 = smul.addr %s225, 8
        %s227 = scalar_lea.vmem %s2, %s226
        %v228 = vld [vmem:[%s219] sm:$0xff]
        %v229 = vld [vmem:[%s223] sm:$0xff]
        %v230 = vld [vmem:[%s227] sm:$0xff]
        %v231 = vsub.f32 0.0, %v230
        %v232 = vmul.f32 %v228, %v228
        %234 = vset.pattern.permute.xlu0 0
        %235 = vperm.xlu0 %234, %v231
        %v236 = vpop.permute.xlu0 %235
        %v238 = vmul.f32 %v236, %v232
        %v239 = vmul.f32 %v238, 1.442695
        %v240 = vpow.pop %v239
        %242 = vset.pattern.permute.xlu0 0
        %243 = vperm.xlu0 %242, %v229
        %v244 = vpop.permute.xlu0 %243
        %v246 = vmul.f32 %v244, %v228
        %v247 = vand.u32 2147483647, %v246
        %vm248 = vcmp.le.f32.partialorder %v247, 0.7853982
        %vm249 = vcmp.lt.s32.totalorder %v246, 0
        %v250 = vand.u32 %v246, 2139095040
        %v251 = vshrl.u32 %v250, 23
        %v252 = vsub.s32 %v251, 127
        %v253 = vand.u32 2147483647, %v246
        %v254 = vand.u32 %v253, 8388607
        %v255 = vor.u32 %v254, 8388608
        %v256 = vsub.s32 0, %v255
        %v257 = vadd.s32 %v252, 1
        %vm258 = vcmp.gt.s32.totalorder %v257, 0
        %v259 = vsel %vm258, %v257, 0
        %v260 = vshrl.u32 %v259, 5
        %v261 = vand.u32 %v259, 31
        %v262 = vsub.s32 32, %v261
        %v263 = vshrl.u32 683565275, %v262
        %v264 = vshll.u32 683565275, %v261
        %v265 = vshrl.u32 2475754826, %v262
        %v266 = vor.u32 %v264, %v265
        %v267 = vshll.u32 2475754826, %v261
        %v268 = vshrl.u32 2131351028, %v262
        %v269 = vor.u32 %v267, %v268
        %v270 = vshll.u32 2131351028, %v261
        %v271 = vshrl.u32 2102212464, %v262
        %v272 = vor.u32 %v270, %v271
        %v273 = vshll.u32 2102212464, %v261
        %v274 = vshrl.u32 920167782, %v262
        %v275 = vor.u32 %v273, %v274
        %v276 = vshll.u32 920167782, %v261
        %v277 = vshrl.u32 1326507024, %v262
        %v278 = vor.u32 %v276, %v277
        %vm279 = vcmp.lt.s32.totalorder %v260, 1
        %vm280 = vcmp.lt.s32.totalorder %v260, 2
        %vm281 = vcmp.lt.s32.totalorder %v260, 3
        %vm282 = vcmp.lt.s32.totalorder %v260, 4
        %v283 = vsel %vm279, %v263, %v266
        %v284 = vsel %vm282, %v272, 2102212464
        %v285 = vsel %vm281, %v269, %v284
        %v286 = vsel %vm280, %v283, %v285
        %v287 = vsel %vm279, %v266, %v269
        %v288 = vsel %vm282, %v275, 920167782
        %v289 = vsel %vm281, %v272, %v288
        %v290 = vsel %vm280, %v287, %v289
        %v291 = vsel %vm279, %v269, %v272
        %v292 = vsel %vm282, %v278, 1326507024
        %v293 = vsel %vm281, %v275, %v292
        %v294 = vsel %vm280, %v291, %v293
        %v295 = vshll.u32 %v255, 8
        %v296 = vmul.u32.u64.compose %v295, %v294
        %v297 = vextract.low.u32 %v296
        %v298 = vextract.high.u32 %v296
        %v299 = vmul.u32.u64.compose %v295, %v290
        %v300 = vextract.low.u32 %v299
        %v301 = vextract.high.u32 %v299
        %v302 = vmul.u32 %v295, %v286
        %v303 = vadd.s32 %v298, %v300
        %vm304 = vc.u32 %v298, %v300
        %v305 = vadd.s32 %v301, 1
        %v306 = vsel %vm304, %v305, %v301
        %v307 = vadd.s32 %v302, %v306
        %v308 = vadd.s32 %v307, 536870912
        %v309 = vshrl.u32 %v308, 30
        %v310 = vshll.u32 %v309, 30
        %v311 = vsub.s32 %v307, %v310
        %vm312 = vcmp.lt.s32.totalorder %v311, 0
        %v313 = vsub.s32 0, %v311
        %v314 = vsel %vm312, %v313, %v311
        %v315 = vclz %v314
        %v316 = vsub.s32 %v315, 2
        %vm317 = vcmp.gt.s32.totalorder 0, %v316
        %v318 = vsel %vm317, 0, %v316
        %v319 = vsub.s32 32, %v318
        %v320 = vshll.u32 %v311, %v318
        %v321 = vshrl.u32 %v303, %v319
        %v322 = vor.u32 %v320, %v321
        %v323 = vsub.s32 4294967266, %v318
        %v324 = vadd.s32 %v323, 127
        %v325 = vshll.u32 %v324, 23
        %v326 = vor.u32 4788187, %v325
        %v327 = vand.u32 2147483647, %v326
        %v329 = vcvt.s32.f32 %v322
        %v330 = vmul.f32 %v329, %v327
        %v331 = vxor.u32 %v330, 2147483648
        %v332 = vsel %vm249, %v331, %v330
        %v333 = vsub.s32 4, %v309
        %v334 = vsel %vm249, %v333, %v309
        %v335 = vsel %vm248, %v246, %v332
        %v336 = vsel %vm248, 0, %v334
        %v337 = vcosq.f32.pop %v335
        %v338 = vsinq.f32.pop %v335
        %vm339 = vweird.f32 %v246
        %v340 = vand.u32 %v336, 3
        %vm341 = vcmp.lt.s32.totalorder %v340, 2
        %vm342 = vcmp.eq.s32.totalorder %v340, 0
        %v343 = vxor.u32 %v338, 2147483648
        %v344 = vsel %vm342, %v337, %v343
        %vm345 = vcmp.eq.s32.totalorder %v340, 2
        %v346 = vxor.u32 %v337, 2147483648
        %v347 = vsel %vm345, %v346, %v338
        %v348 = vsel %vm341, %v344, %v347
        %v349 = vsel %vm339, nan, %v348
        %v350 = vmul.f32 %v240, %v349
        %v351 = vmul.f32 %v228, %v350
        %352 = vst [vmem:[%s211] sm:$0xff] %v351
        %s353 = sand.u32 %s119, 1
        %s354 = scalar_lea.sflag [#allocation3], %s353
        %s355 = sand.u32 %s119, 1
        %s356 = smul.addr %s355, 8
        %s357 = scalar_lea.vmem [#allocation2], %s356
        // Predicated region
        $region33: #{tpu_custom_call.1} parent=31 // pred_check
          %p358 = pneg %p129
        $region34: #{tpu_custom_call.1} parent=31 // pred_check_branch
          %360 = sbr.rel (%p358) target = $region36
        $region35: #{tpu_custom_call.1} parent=31 // pred_region
          %s362 = ssub.s32 128, 128
          %363 = vsyncadd %s354, %s362
          %s364 = smul.addr %s21, 2
          %s365 = sadd.s32 %s22, %s364
          %s366 = smul.addr %s365, 128
          %s367 = scalar_lea.hbm %s3, %s366
          %s369 = sshll.u32 %s357, 4
          %s370 = int_to_ptr.vmem [resolvable:$true] %s369
          %372 = dma.vmem_to_hbm [thread:$0]  %s370, 128, %s367, %s354
        $region36: #{tpu_custom_call.1} parent=31 // pred_fallthru
          _
      $region32: #{tpu_custom_call.1} parent=5 // pred_fallthru
        _
      %p373 = scmp.le.s32.totalorder 2, %s12
      // Predicated region
      $region37: #{tpu_custom_call.1} parent=5 // pred_check
        %p374 = pneg %p373
      $region38: #{tpu_custom_call.1} parent=5 // pred_check_branch
        %376 = sbr.rel (%p374) target = $region40
      $region39: #{tpu_custom_call.1} parent=5 // pred_region
        %s377 = ssub.s32 %s12, 2
        // Predicated region
        $region41: #{tpu_custom_call.1} parent=39 // pred_check
          %p378 = pneg %p135
        $region42: #{tpu_custom_call.1} parent=39 // pred_check_branch
          %380 = sbr.rel (%p378) target = $region44
        $region43: #{tpu_custom_call.1} parent=39 // pred_region
          %s381 = sand.u32 %s120, 1
          %s382 = scalar_lea.sflag [#allocation3], %s381
          %s383 = sand.u32 %s120, 1
          %s384 = smul.addr %s383, 8
          %s385 = scalar_lea.vmem [#allocation2], %s384
          %386 = dma.done %s382, 128
        $region44: #{tpu_custom_call.1} parent=39 // pred_fallthru
          _
      $region40: #{tpu_custom_call.1} parent=5 // pred_fallthru
        _
    $region6: #{tpu_custom_call.1} parent=1 // loop_footer
      %s16 = sadd.s32 1, %s12
    $region7: #{tpu_custom_call.1} parent=1 // loop_footer_branch
      %11 = sbr.rel target = $region3
    $region8: #{tpu_custom_call.1} parent=1 // loop_exit
      _
    %387 = vsyncpa [#allocation3], 1
    %s388 = scalar_lea.sflag [#allocation3], 1
    %389 = vsyncpa %s388, 1

</llo_original>
